<compile_context>
chip_gen: v6e
topology: v6e:2x2x1
jax: 0.10.0
libtpu: 0.0.40
codegen_flags: <defaults>
</compile_context>

<pallas_src>
import functools

import jax
import jax.numpy as jnp
from jax import lax
from jax.experimental import pallas as pl
from jax.experimental.pallas import tpu as pltpu


def _round_up(x, m):
    return ((x + m - 1) // m) * m


def lmix_kernel(states_ref, qs_ref, ww_ref, bw_ref, wb_ref, bb_ref, out_ref):
    """One row-tile of the fused LMixer forward, agent axis on sublanes.

    states_ref : (tm, state_dim)        row tile of flattened states
    qs_ref     : (n_agents, tm)         agent Qs, transposed (lane-dense)
    ww_ref     : (n_agents, state_dim)  fused weight head  (wv @ ww)^T
    bw_ref     : (n_agents, 1)          fused bias   head  (bv @ ww + bw)^T
    wb_ref     : (1, state_dim)         fused state-bias weight (wv @ wb)^T
    bb_ref     : (1, 1)                 fused state-bias bias   (bv @ wb + bb)^T
    out_ref    : (1, tm)                lane-dense q_tot row for this tile
    """
    nt = (((1,), (1,)), ((), ()))   # contract both operands on their last dim

    # Pre-|.| mixing weights, computed directly in (n_agents, tm) orientation.
    y_w = lax.dot_general(ww_ref[...], states_ref[...], dimension_numbers=nt,
                          preferred_element_type=jnp.float32) + bw_ref[...]
    # Per-row state bias, directly lane-dense (1, tm).
    y_b = lax.dot_general(wb_ref[...], states_ref[...], dimension_numbers=nt,
                          preferred_element_type=jnp.float32) + bb_ref[...]

    # q_tot[r] = sum_a qs[a, r] * |w[a, r]| + b[r]; the agent reduction is a
    # cheap <=8-sublane reduce and the result stays lane-dense.
    z = qs_ref[...].astype(jnp.float32) * jnp.abs(y_w)
    out_ref[...] = (jnp.sum(z, axis=0, keepdims=True) + y_b).astype(out_ref.dtype)


def _choose_tile(N, state_dim, tm_max, vmem_budget_bytes):
    """Row-tile choice: large (amortize per-step overhead), VMEM-budgeted,
    multiple of 128, and small enough that big problems keep >= 2 grid steps
    (so the single 'parallel' axis can shard across v7x's two TensorCores)."""
    # fp32, sublane-padded footprint of one pipeline buffer, per row:
    per_row_bytes = state_dim * 4 + 8 * 4 + 8 * 4   # states + qs col + out col
    tm = vmem_budget_bytes // per_row_bytes
    tm = min(tm, tm_max, _round_up(N, 128))
    if N > 256:                                     # enough rows for two tiles
        tm = min(tm, _round_up(-(-N // 2), 128))
    return max(128, (tm // 128) * 128)


@functools.partial(jax.jit, static_argnames=("tm_max",))
def lmixer_forward(agent_qs, states, params, tm_max=8192):
    """agent_qs: (bs, T, n_agents, 1), states: (bs, T, state_dim) -> (bs, T, 1)."""
    bs, T = states.shape[:2]
    n_agents = agent_qs.shape[2]
    N = bs * T

    states2 = states.reshape(N, -1)                 # streamed in input dtype
    state_dim = states2.shape[1]
    # Lane-dense qs: small (N, n_agents) -> (n_agents, N) transpose; its HBM
    # cost is tiny next to the states stream and it makes the qs DMA dense.
    qs_t = agent_qs.reshape(N, n_agents).T

    # --- Fold f_v into the two hyper heads (forward only; there is no
    #     nonlinearity between f_v and hyper_w / hyper_b). Kept in f32. ------
    wv = params["wv"].astype(jnp.float32)
    bv = params["bv"].astype(jnp.float32)
    ww = params["ww"].astype(jnp.float32)
    bw = params["bw"].astype(jnp.float32)
    wb = params["wb"].astype(jnp.float32)
    bb = params["bb"].astype(jnp.float32)
    ww_t = (wv @ ww).T                  # (n_agents, state_dim)
    bw_c = (bv @ ww + bw).T             # (n_agents, 1)
    wb_t = (wv @ wb).T                  # (1, state_dim)
    bb_c = (bv @ wb + bb).T             # (1, 1)

    vmem_budget = 8 * 1024 * 1024       # per pipeline buffer; x2 double-buffered
    tm = _choose_tile(N, state_dim, tm_max, vmem_budget)
    num_tiles = pl.cdiv(N, tm)          # partial last block: output writes masked

    fixed = lambda i: (0, 0)            # weights/biases: same block every step

    out = pl.pallas_call(
        lmix_kernel,
        out_shape=jax.ShapeDtypeStruct((1, N), jnp.float32),
        grid=(num_tiles,),
        in_specs=[
            pl.BlockSpec((tm, state_dim), lambda i: (i, 0)),
            pl.BlockSpec((n_agents, tm), lambda i: (0, i)),
            pl.BlockSpec((n_agents, state_dim), fixed),
            pl.BlockSpec((n_agents, 1), fixed),
            pl.BlockSpec((1, state_dim), fixed),
            pl.BlockSpec((1, 1), fixed),
        ],
        out_specs=pl.BlockSpec((1, tm), lambda i: (0, i)),
        compiler_params=pltpu.CompilerParams(
            dimension_semantics=("parallel",),
            vmem_limit_bytes=32 * 1024 * 1024),
    )(states2, qs_t, ww_t, bw_c, wb_t, bb_c)

    return out[0, :].reshape(bs, T, 1)


def init_params(key, state_dim, embed_dim, n_agents):
    """PyTorch-Linear-style init: U(-1/sqrt(fan_in), 1/sqrt(fan_in))."""
    ks = jax.random.split(key, 6)

    def lin(kw, kb, fan_in, fan_out):
        bound = 1.0 / jnp.sqrt(fan_in)
        w = jax.random.uniform(kw, (fan_in, fan_out), jnp.float32, -bound, bound)
        b = jax.random.uniform(kb, (1, fan_out), jnp.float32, -bound, bound)
        return w, b

    wv, bv = lin(ks[0], ks[1], state_dim, embed_dim)   # f_v
    ww, bw = lin(ks[2], ks[3], embed_dim, n_agents)    # hyper_w
    wb, bb = lin(ks[4], ks[5], embed_dim, 1)           # hyper_b
    return {"wv": wv, "bv": bv, "ww": ww, "bw": bw, "wb": wb, "bb": bb}


def lmixer_reference(agent_qs, states, params):
    """Un-fused reference mirroring the PyTorch module exactly."""
    bs, T = states.shape[:2]
    n_agents = agent_qs.shape[2]
    s = states.reshape(bs * T, -1)
    x = s @ params["wv"] + params["bv"]
    w = jnp.abs(x @ params["ww"] + params["bw"]).reshape(bs, T, n_agents, 1)
    b = (x @ params["wb"] + params["bb"]).reshape(bs, T, 1)
    return (agent_qs * w).sum(axis=2) + b


if __name__ == "__main__":
    key = jax.random.PRNGKey(0)
    k_p, k_q, k_s, k_q2, k_s2 = jax.random.split(key, 5)

    n_agents, state_dim, embed_dim = 4, 32, 32
    params = init_params(k_p, state_dim, embed_dim, n_agents)

    # Case 1: tiny problem, N=26 (not a tile multiple) -> masked output tail.
    bs, T = 2, 13
    agent_qs = jax.random.normal(k_q, (bs, T, n_agents, 1), jnp.float32)
    states = jax.random.normal(k_s, (bs, T, state_dim), jnp.float32)
    q_tot = jax.block_until_ready(lmixer_forward(agent_qs, states, params))
    ref = lmixer_reference(agent_qs, states, params)
    assert q_tot.shape == (bs, T, 1), q_tot.shape
    err = jnp.max(jnp.abs(q_tot - ref))
    assert jnp.allclose(q_tot, ref, atol=1e-3, rtol=1e-3), f"max err {err}"

    # Case 2: multi-tile grid (N=2400 -> tm=1280, 2 steps, partial last block).
    bs2, T2 = 4, 600
    agent_qs2 = jax.random.normal(k_q2, (bs2, T2, n_agents, 1), jnp.float32)
    states_b = jax.random.normal(k_s2, (bs2, T2, state_dim), jnp.float32)
    q_tot2 = jax.block_until_ready(lmixer_forward(agent_qs2, states_b, params))
    ref2 = lmixer_reference(agent_qs2, states_b, params)
    assert q_tot2.shape == (bs2, T2, 1), q_tot2.shape
    err2 = jnp.max(jnp.abs(q_tot2 - ref2))
    assert jnp.allclose(q_tot2, ref2, atol=1e-3, rtol=1e-3), f"max err {err2}"

    print("KERNEL_OK")
</pallas_src>

<mosaic_0001>
module attributes {stable_mosaic.version = 11 : i64} {
  func.func @lmix_kernel(%arg0: i32, %arg1: memref<128x32xf32, #tpu.memory_space<vmem>>, %arg2: memref<4x128xf32, #tpu.memory_space<vmem>>, %arg3: memref<4x32xf32, #tpu.memory_space<vmem>>, %arg4: memref<4x1xf32, #tpu.memory_space<vmem>>, %arg5: memref<1x32xf32, #tpu.memory_space<vmem>>, %arg6: memref<1x1xf32, #tpu.memory_space<vmem>>, %arg7: memref<1x128xf32, #tpu.memory_space<vmem>>) attributes {dimension_semantics = [#tpu.dimension_semantics<parallel>], iteration_bounds = array<i64: 1>, scalar_prefetch = 0 : i64, scratch_operands = 0 : i64, tpu.core_type = #tpu.core_type<tc>, window_params = [{transform_indices = @transform_0, window_bounds = array<i64: 128, 32>}, {transform_indices = @transform_1, window_bounds = array<i64: 4, 128>}, {pipeline_mode = #tpu.pipeline_mode<synchronous>, transform_indices = @transform_2, window_bounds = array<i64: 4, 32>}, {pipeline_mode = #tpu.pipeline_mode<synchronous>, transform_indices = @transform_3, window_bounds = array<i64: 4, 1>}, {pipeline_mode = #tpu.pipeline_mode<synchronous>, transform_indices = @transform_4, window_bounds = array<i64: 1, 32>}, {pipeline_mode = #tpu.pipeline_mode<synchronous>, transform_indices = @transform_5, window_bounds = array<i64: 1, 1>}, {transform_indices = @transform_6, window_bounds = array<i64: 1, 128>}]} {
    %c0 = arith.constant 0 : index
    %c0_0 = arith.constant 0 : index
    %0 = vector.load %arg3[%c0, %c0_0] : memref<4x32xf32, #tpu.memory_space<vmem>>, vector<4x32xf32>
    %c0_1 = arith.constant 0 : index
    %c0_2 = arith.constant 0 : index
    %1 = vector.load %arg1[%c0_1, %c0_2] : memref<128x32xf32, #tpu.memory_space<vmem>>, vector<128x32xf32>
    %cst = arith.constant dense<0.000000e+00> : vector<4x128xf32>
    %2 = tpu.matmul %0, %1, %cst {dimension_numbers = #tpu.dot_dimension_numbers<[1], [1], [0], [0], [0, 0, 1, 0], [], []>} : vector<4x32xf32>, vector<128x32xf32>, vector<4x128xf32> -> vector<4x128xf32>
    %c0_3 = arith.constant 0 : index
    %c0_4 = arith.constant 0 : index
    %3 = vector.load %arg4[%c0_3, %c0_4] : memref<4x1xf32, #tpu.memory_space<vmem>>, vector<4x1xf32>
    %4 = vector.broadcast %3 : vector<4x1xf32> to vector<4x128xf32>
    %5 = arith.addf %2, %4 : vector<4x128xf32>
    %c0_5 = arith.constant 0 : index
    %c0_6 = arith.constant 0 : index
    %6 = vector.load %arg5[%c0_5, %c0_6] : memref<1x32xf32, #tpu.memory_space<vmem>>, vector<1x32xf32>
    %c0_7 = arith.constant 0 : index
    %c0_8 = arith.constant 0 : index
    %7 = vector.load %arg1[%c0_7, %c0_8] : memref<128x32xf32, #tpu.memory_space<vmem>>, vector<128x32xf32>
    %cst_9 = arith.constant dense<0.000000e+00> : vector<1x128xf32>
    %8 = tpu.matmul %6, %7, %cst_9 {dimension_numbers = #tpu.dot_dimension_numbers<[1], [1], [0], [0], [0, 0, 1, 0], [], []>} : vector<1x32xf32>, vector<128x32xf32>, vector<1x128xf32> -> vector<1x128xf32>
    %c0_10 = arith.constant 0 : index
    %c0_11 = arith.constant 0 : index
    %9 = vector.load %arg6[%c0_10, %c0_11] : memref<1x1xf32, #tpu.memory_space<vmem>>, vector<1x1xf32>
    %10 = vector.broadcast %9 : vector<1x1xf32> to vector<1x128xf32>
    %11 = arith.addf %8, %10 : vector<1x128xf32>
    %c0_12 = arith.constant 0 : index
    %c0_13 = arith.constant 0 : index
    %12 = vector.load %arg2[%c0_12, %c0_13] : memref<4x128xf32, #tpu.memory_space<vmem>>, vector<4x128xf32>
    %13 = math.absf %5 : vector<4x128xf32>
    %14 = arith.mulf %12, %13 : vector<4x128xf32>
    %cst_14 = arith.constant dense<0.000000e+00> : vector<128xf32>
    %15 = vector.multi_reduction <add>, %14, %cst_14 [0] : vector<4x128xf32> to vector<128xf32>
    %16 = vector.shape_cast %15 : vector<128xf32> to vector<1x128xf32>
    %17 = arith.addf %16, %11 : vector<1x128xf32>
    %c0_15 = arith.constant 0 : index
    %c0_16 = arith.constant 0 : index
    %18 = vector.load %arg7[%c0_15, %c0_16] : memref<1x128xf32, #tpu.memory_space<vmem>>, vector<1x128xf32>
    tpu.vector_store %arg7[%c0_15, %c0_16], %17 {strides = array<i32>} : memref<1x128xf32, #tpu.memory_space<vmem>>, vector<1x128xf32>,
    return
  }
  func.func @transform_0(%arg0: i32) -> (i32, i32) {
    %c0_i32 = arith.constant 0 : i32
    %c0_i32_0 = arith.constant 0 : i32
    return %arg0, %c0_i32 : i32, i32
  }
  func.func @transform_1(%arg0: i32) -> (i32, i32) {
    %c0_i32 = arith.constant 0 : i32
    %c0_i32_0 = arith.constant 0 : i32
    return %c0_i32, %arg0 : i32, i32
  }
  func.func @transform_2(%arg0: i32) -> (i32, i32) {
    %c0_i32 = arith.constant 0 : i32
    %c0_i32_0 = arith.constant 0 : i32
    %c0_i32_1 = arith.constant 0 : i32
    return %c0_i32, %c0_i32_0 : i32, i32
  }
  func.func @transform_3(%arg0: i32) -> (i32, i32) {
    %c0_i32 = arith.constant 0 : i32
    %c0_i32_0 = arith.constant 0 : i32
    %c0_i32_1 = arith.constant 0 : i32
    return %c0_i32, %c0_i32_0 : i32, i32
  }
  func.func @transform_4(%arg0: i32) -> (i32, i32) {
    %c0_i32 = arith.constant 0 : i32
    %c0_i32_0 = arith.constant 0 : i32
    %c0_i32_1 = arith.constant 0 : i32
    return %c0_i32, %c0_i32_0 : i32, i32
  }
  func.func @transform_5(%arg0: i32) -> (i32, i32) {
    %c0_i32 = arith.constant 0 : i32
    %c0_i32_0 = arith.constant 0 : i32
    %c0_i32_1 = arith.constant 0 : i32
    return %c0_i32, %c0_i32_0 : i32, i32
  }
  func.func @transform_6(%arg0: i32) -> (i32, i32) {
    %c0_i32 = arith.constant 0 : i32
    %c0_i32_0 = arith.constant 0 : i32
    return %c0_i32, %arg0 : i32, i32
  }
}

</mosaic_0001>

<llo_original>
// kernel: squeeze.1
$region0: #{squeeze.1}
  %s0 = inlined_call_operand.vmem [shape: f32[26], index: 0, kind: input, shape index: {}]
  %s1 = inlined_call_operand.hbm [shape: f32[2,13,1], index: 1, kind: output, shape index: {}]
  $region1: #{squeeze.1} parent=0
    #allocation0 [shape = 'u8[1024]{0}', space=vmem, size = 0x400, scoped, tag = 'operand span for operand 1']
    #allocation1 [shape = 's32[1]{0}', space=sflag, size = 0x4, scoped, tag = 'scoped memory for squeeze.1']
    #allocation2 [shape = 'u8[4096]{0}', space=vmem, size = 0x1000, scoped, tag = 'scoped mem for output reshape']
    #allocation3 [shape = 'u8[4096]{0}', space=vmem, size = 0x1000, scoped, tag = 'scoped mem for input reshape']
    %2 = vsyncpa [#allocation1], 0
    %s4 = sshll.u32 1, 1
    %s5 = ssub.s32 %s4, 1
    %v6 = vld [vmem:[%s0] sm:%s5]
    %7 = vst [vmem:[#allocation3] sm:%s5] %v6
    %v8 = vld [vmem:[#allocation3] sm:$0x1]
    %vm9 = vcmask 105472
    %10 = vst.msk [vmem:[#allocation2] sm:$0x1] %vm9, %v8
    %v11 = vld [vmem:[#allocation3] sm:$0x1]
    %12 = vrot.lane.b32.xlu0 %v11, 115
    %v13 = vpop.permute.xlu0 %12
    %vm14 = vcmask 105472
    %s15 = scalar_lea.vmem [#allocation2], 1
    %16 = vst.msk [vmem:[%s15] sm:$0x1] %vm14, %v13
    %s18 = sshll.u32 1, 2
    %s19 = ssub.s32 %s18, 1
    %v21 = vld [vmem:[#allocation2] sm:%s19]
    %s22 = sshll.u32 1, 2
    %s23 = ssub.s32 %s22, 1
    %24 = vst [vmem:[#allocation0] sm:%s23] %v21
    %s26 = ssub.s32 32, 32
    %27 = vsyncadd [#allocation1], %s26
    %s29 = sshll.u32 [#allocation0], 4
    %s30 = int_to_ptr.vmem [resolvable:$true] %s29
    %32 = dma.vmem_to_hbm [thread:$0]  %s30, 32, %s1, [#allocation1]
    %33 = dma.done [#allocation1], 32
    %34 = vsyncpa [#allocation1], 1

// kernel: lmixer_forward.1
$region0: #{lmixer_forward.1}
  #allocation0 [shape = 'u32[]', space=smem, size = 0x4, offset = 0x4, fixed_abs, tag = 'smem constant byte address 0x4 - core index']
  #allocation1 [shape = 'u32[144,128]{1,0:T(1,128)}', space=vmem, size = 0x12000, scoped, tag = 'internal scratch']
  #allocation2 [shape = 'f32[1,1]{1,0:T(1,128)S(1)}', space=vmem, size = 0x200, scoped, tag = 'scoped memory for lmixer_forward.1']
  %s0 = inlined_call_operand.vmem [shape: f32[26,32], index: 0, kind: input, shape index: {}]
  %s1 = inlined_call_operand.vmem [shape: f32[4,26], index: 1, kind: input, shape index: {}]
  %s2 = inlined_call_operand.vmem [shape: f32[4,32], index: 2, kind: input, shape index: {}]
  %s3 = inlined_call_operand.vmem [shape: f32[4,1], index: 3, kind: input, shape index: {}]
  %s4 = inlined_call_operand.vmem [shape: f32[1,32], index: 4, kind: input, shape index: {}]
  %s5 = inlined_call_operand.<no memory space> [shape: f32[1,1], index: 5, kind: input, shape index: {}]
  %s6 = inlined_call_operand.vmem [shape: f32[1,26], index: 6, kind: output, shape index: {}]
  %s7 = sld [smem:[#allocation0]]
  $region34: #{lmixer_forward.1} parent=0
    _
  %s9 = ssub.s32 1, %s7
  %s10 = scalar_select 0, %s9, %s7
  %v11 = vstv %s5
  %12 = vst [vmem:[#allocation2] sm:$0x1] %v11
  // Predicated region
  $region2: #{lmixer_forward.1} parent=0 // pred_check
    _
  $region3: #{lmixer_forward.1} parent=0 // pred_check_branch
    %14 = sbr.rel (0) target = $region5
  $region4: #{lmixer_forward.1} parent=0 // pred_region
    _
  $region5: #{lmixer_forward.1} parent=0 // pred_fallthru
    _
  // Predicated region
  $region6: #{lmixer_forward.1} parent=0 // pred_check
    _
  $region7: #{lmixer_forward.1} parent=0 // pred_check_branch
    %16 = sbr.rel (0) target = $region9
  $region8: #{lmixer_forward.1} parent=0 // pred_region
    _
  $region9: #{lmixer_forward.1} parent=0 // pred_fallthru
    _
  // Predicated region
  $region10: #{lmixer_forward.1} parent=0 // pred_check
    _
  $region11: #{lmixer_forward.1} parent=0 // pred_check_branch
    %18 = sbr.rel (0) target = $region13
  $region12: #{lmixer_forward.1} parent=0 // pred_region
    _
  $region13: #{lmixer_forward.1} parent=0 // pred_fallthru
    _
  // Predicated region
  $region14: #{lmixer_forward.1} parent=0 // pred_check
    _
  $region15: #{lmixer_forward.1} parent=0 // pred_check_branch
    %20 = sbr.rel (0) target = $region17
  $region16: #{lmixer_forward.1} parent=0 // pred_region
    _
  $region17: #{lmixer_forward.1} parent=0 // pred_fallthru
    _
  // Predicated region
  $region18: #{lmixer_forward.1} parent=0 // pred_check
    _
  $region19: #{lmixer_forward.1} parent=0 // pred_check_branch
    %22 = sbr.rel (0) target = $region21
  $region20: #{lmixer_forward.1} parent=0 // pred_region
    _
  $region21: #{lmixer_forward.1} parent=0 // pred_fallthru
    _
  // Predicated region
  $region22: #{lmixer_forward.1} parent=0 // pred_check
    _
  $region23: #{lmixer_forward.1} parent=0 // pred_check_branch
    %24 = sbr.rel (0) target = $region25
  $region24: #{lmixer_forward.1} parent=0 // pred_region
    _
  $region25: #{lmixer_forward.1} parent=0 // pred_fallthru
    _
  %v25 = vld [vmem:[%s2] sm:$0xf]
  %v26 = vld [vmem:[%s0] sm:$0xff]
  %v27 = vld [vmem:[%s0 + $0x8] sm:$0xff]
  %v28 = vld [vmem:[%s0 + $0x10] sm:$0xff]
  %v29 = vld [vmem:[%s0 + $0x18] sm:$0xff]
  %v30 = vld [vmem:[%s0 + $0x20] sm:$0xff]
  %v31 = vld [vmem:[%s0 + $0x28] sm:$0xff]
  %v32 = vld [vmem:[%s0 + $0x30] sm:$0xff]
  %v33 = vld [vmem:[%s0 + $0x38] sm:$0xff]
  %v34 = vld [vmem:[%s0 + $0x40] sm:$0xff]
  %v35 = vld [vmem:[%s0 + $0x48] sm:$0xff]
  %v36 = vld [vmem:[%s0 + $0x50] sm:$0xff]
  %v37 = vld [vmem:[%s0 + $0x58] sm:$0xff]
  %v38 = vld [vmem:[%s0 + $0x60] sm:$0xff]
  %v39 = vld [vmem:[%s0 + $0x68] sm:$0xff]
  %v40 = vld [vmem:[%s0 + $0x70] sm:$0xff]
  %v41 = vld [vmem:[%s0 + $0x78] sm:$0xff]
  %v42 = vld [vmem:[%s3] sm:$0xf]
  %44 = vset.pattern.permute.xlu0 0
  %45 = vperm.xlu0 %44, %v42
  %v46 = vpop.permute.xlu0 %45
  %vm48 = vcmask 261120
  %v50 = vsel %vm48, %v25, 0
  %v53 = vsel %vm48, %v26, 0
  %v56 = vsel %vm48, %v27, 0
  %v59 = vsel %vm48, %v28, 0
  %v62 = vsel %vm48, %v29, 0
  %v65 = vsel %vm48, %v30, 0
  %v68 = vsel %vm48, %v31, 0
  %v71 = vsel %vm48, %v32, 0
  %v74 = vsel %vm48, %v33, 0
  %v77 = vsel %vm48, %v34, 0
  %v80 = vsel %vm48, %v35, 0
  %v83 = vsel %vm48, %v36, 0
  %v86 = vsel %vm48, %v37, 0
  %v89 = vsel %vm48, %v38, 0
  %v92 = vsel %vm48, %v39, 0
  %v95 = vsel %vm48, %v40, 0
  %v98 = vsel %vm48, %v41, 0
  %100 = vmatprep.subr.mxu0 0.0
  %101 = vmatpush1.xpose.msra.mxu0 %v98
  %102 = vmatprep.subr.mxu0 0.0
  %103 = vmatpush1.xpose.msra.mxu0 %v95
  %104 = vmatprep.subr.mxu0 0.0
  %105 = vmatpush1.xpose.msra.mxu0 %v92
  %106 = vmatprep.subr.mxu0 0.0
  %107 = vmatpush1.xpose.msra.mxu0 %v89
  %108 = vmatprep.subr.mxu0 0.0
  %109 = vmatpush1.xpose.msra.mxu0 %v86
  %110 = vmatprep.subr.mxu0 0.0
  %111 = vmatpush1.xpose.msra.mxu0 %v83
  %112 = vmatprep.subr.mxu0 0.0
  %113 = vmatpush1.xpose.msra.mxu0 %v80
  %114 = vmatprep.subr.mxu0 0.0
  %115 = vmatpush1.xpose.msra.mxu0 %v77
  %116 = vmatprep.subr.mxu0 0.0
  %117 = vmatpush1.xpose.msra.mxu0 %v74
  %118 = vmatprep.subr.mxu0 0.0
  %119 = vmatpush1.xpose.msra.mxu0 %v71
  %120 = vmatprep.subr.mxu0 0.0
  %121 = vmatpush1.xpose.msra.mxu0 %v68
  %122 = vmatprep.subr.mxu0 0.0
  %123 = vmatpush1.xpose.msra.mxu0 %v65
  %124 = vmatprep.subr.mxu0 0.0
  %125 = vmatpush1.xpose.msra.mxu0 %v62
  %126 = vmatprep.subr.mxu0 0.0
  %127 = vmatpush1.xpose.msra.mxu0 %v59
  %128 = vmatprep.subr.mxu0 0.0
  %129 = vmatpush1.xpose.msra.mxu0 %v56
  %130 = vmatprep.subr.mxu0 0.0
  %131 = vmatpush1.xpose.msra.mxu0 %v53
  %132 = vmatprep.subr.mxu0 0.0
  %133 = vmatpush2.xpose.msra.mxu0 0.0
  %134 = vmatprep.subr.mxu0 0.0
  %135 = vmatpush2.xpose.msra.mxu0 0.0
  %136 = vmatprep.subr.mxu0 0.0
  %137 = vmatpush2.xpose.msra.mxu0 0.0
  %138 = vmatprep.subr.mxu0 0.0
  %139 = vmatpush2.xpose.msra.mxu0 0.0
  %140 = vmatprep.subr.mxu0 0.0
  %141 = vmatpush2.xpose.msra.mxu0 0.0
  %142 = vmatprep.subr.mxu0 0.0
  %143 = vmatpush2.xpose.msra.mxu0 0.0
  %144 = vmatprep.subr.mxu0 0.0
  %145 = vmatpush2.xpose.msra.mxu0 0.0
  %146 = vmatprep.subr.mxu0 0.0
  %147 = vmatpush2.xpose.msra.mxu0 0.0
  %148 = vmatprep.subr.mxu0 0.0
  %149 = vmatpush2.xpose.msra.mxu0 0.0
  %150 = vmatprep.subr.mxu0 0.0
  %151 = vmatpush2.xpose.msra.mxu0 0.0
  %152 = vmatprep.subr.mxu0 0.0
  %153 = vmatpush2.xpose.msra.mxu0 0.0
  %154 = vmatprep.subr.mxu0 0.0
  %155 = vmatpush2.xpose.msra.mxu0 0.0
  %156 = vmatprep.subr.mxu0 0.0
  %157 = vmatpush2.xpose.msra.mxu0 0.0
  %158 = vmatprep.subr.mxu0 0.0
  %159 = vmatpush2.xpose.msra.mxu0 0.0
  %160 = vmatprep.subr.mxu0 0.0
  %161 = vmatpush2.xpose.msra.mxu0 0.0
  %162 = vmatprep.subr.mxu0 0.0
  %163 = vmatpush2.xpose.msra.mxu0 0.0
  %164 = vmatprep.mubr.f32.mxu0 0.0
  %165 = vmatmul.mubr.f32.gmra.mxu0 %v50
  %v166 = vpop.f32.mrf.mxu0
  %v167 = vadd.f32 %v46, %v166
  %v168 = vpop.f32.mrf.mxu0
  %169 = vdwg.mxu0
  %v170 = vld [vmem:[%s4] sm:$0x1]
  %v171 = vld [vmem:[#allocation2] sm:$0x1]
  %173 = vset.pattern.permute.xlu0 0
  %174 = vperm.xlu0 %173, %v171
  %v175 = vpop.permute.xlu0 %174
  %v177 = vlaneseq
  %v178 = vshrl.u32 %v177, 7
  %v179 = vsub.s32 0, %v178
  %v180 = vrot.slane %v175, %v179
  %v182 = vsel %vm48, %v170, 0
  %184 = vmatprep.subr.mxu0 0.0
  %185 = vmatpush1.xpose.msra.mxu0 %v98
  %186 = vmatprep.subr.mxu0 0.0
  %187 = vmatpush1.xpose.msra.mxu0 %v95
  %188 = vmatprep.subr.mxu0 0.0
  %189 = vmatpush1.xpose.msra.mxu0 %v92
  %190 = vmatprep.subr.mxu0 0.0
  %191 = vmatpush1.xpose.msra.mxu0 %v89
  %192 = vmatprep.subr.mxu0 0.0
  %193 = vmatpush1.xpose.msra.mxu0 %v86
  %194 = vmatprep.subr.mxu0 0.0
  %195 = vmatpush1.xpose.msra.mxu0 %v83
  %196 = vmatprep.subr.mxu0 0.0
  %197 = vmatpush1.xpose.msra.mxu0 %v80
  %198 = vmatprep.subr.mxu0 0.0
  %199 = vmatpush1.xpose.msra.mxu0 %v77
  %200 = vmatprep.subr.mxu0 0.0
  %201 = vmatpush1.xpose.msra.mxu0 %v74
  %202 = vmatprep.subr.mxu0 0.0
  %203 = vmatpush1.xpose.msra.mxu0 %v71
  %204 = vmatprep.subr.mxu0 0.0
  %205 = vmatpush1.xpose.msra.mxu0 %v68
  %206 = vmatprep.subr.mxu0 0.0
  %207 = vmatpush1.xpose.msra.mxu0 %v65
  %208 = vmatprep.subr.mxu0 0.0
  %209 = vmatpush1.xpose.msra.mxu0 %v62
  %210 = vmatprep.subr.mxu0 0.0
  %211 = vmatpush1.xpose.msra.mxu0 %v59
  %212 = vmatprep.subr.mxu0 0.0
  %213 = vmatpush1.xpose.msra.mxu0 %v56
  %214 = vmatprep.subr.mxu0 0.0
  %215 = vmatpush1.xpose.msra.mxu0 %v53
  %216 = vmatprep.subr.mxu0 0.0
  %217 = vmatpush2.xpose.msra.mxu0 0.0
  %218 = vmatprep.subr.mxu0 0.0
  %219 = vmatpush2.xpose.msra.mxu0 0.0
  %220 = vmatprep.subr.mxu0 0.0
  %221 = vmatpush2.xpose.msra.mxu0 0.0
  %222 = vmatprep.subr.mxu0 0.0
  %223 = vmatpush2.xpose.msra.mxu0 0.0
  %224 = vmatprep.subr.mxu0 0.0
  %225 = vmatpush2.xpose.msra.mxu0 0.0
  %226 = vmatprep.subr.mxu0 0.0
  %227 = vmatpush2.xpose.msra.mxu0 0.0
  %228 = vmatprep.subr.mxu0 0.0
  %229 = vmatpush2.xpose.msra.mxu0 0.0
  %230 = vmatprep.subr.mxu0 0.0
  %231 = vmatpush2.xpose.msra.mxu0 0.0
  %232 = vmatprep.subr.mxu0 0.0
  %233 = vmatpush2.xpose.msra.mxu0 0.0
  %234 = vmatprep.subr.mxu0 0.0
  %235 = vmatpush2.xpose.msra.mxu0 0.0
  %236 = vmatprep.subr.mxu0 0.0
  %237 = vmatpush2.xpose.msra.mxu0 0.0
  %238 = vmatprep.subr.mxu0 0.0
  %239 = vmatpush2.xpose.msra.mxu0 0.0
  %240 = vmatprep.subr.mxu0 0.0
  %241 = vmatpush2.xpose.msra.mxu0 0.0
  %242 = vmatprep.subr.mxu0 0.0
  %243 = vmatpush2.xpose.msra.mxu0 0.0
  %244 = vmatprep.subr.mxu0 0.0
  %245 = vmatpush2.xpose.msra.mxu0 0.0
  %246 = vmatprep.subr.mxu0 0.0
  %247 = vmatpush2.xpose.msra.mxu0 0.0
  %248 = vmatprep.mubr.f32.mxu0 0.0
  %249 = vmatmul.mubr.f32.gmra.mxu0 %v182
  %v250 = vpop.f32.mrf.mxu0
  %v251 = vadd.f32 %v180, %v250
  %v252 = vpop.f32.mrf.mxu0
  %253 = vdwg.mxu0
  %v254 = vld [vmem:[%s1] sm:$0xf]
  %v255 = vand.u32 2147483647, %v167
  %v256 = vmul.f32 %v254, %v255
  %vm257 = vcmask 1043456
  %v258 = vsel %vm257, %v256, 0.0
  %v259 = vrot.slane %v258, 4
  %v260 = vadd.f32 %v258, %v259
  %v261 = vrot.slane %v260, 2
  %v262 = vadd.f32 %v260, %v261
  %v263 = vrot.slane %v262, 1
  %v264 = vadd.f32 %v262, %v263
  %v265 = vadd.f32 %v264, %v251
  %266 = vst [vmem:[%s6] sm:$0x1] %v265
  // Predicated region
  $region26: #{lmixer_forward.1} parent=0 // pred_check
    _
  $region27: #{lmixer_forward.1} parent=0 // pred_check_branch
    %268 = sbr.rel (0) target = $region29
  $region28: #{lmixer_forward.1} parent=0 // pred_region
    _
  $region29: #{lmixer_forward.1} parent=0 // pred_fallthru
    _
  // Predicated region
  $region30: #{lmixer_forward.1} parent=0 // pred_check
    _
  $region31: #{lmixer_forward.1} parent=0 // pred_check_branch
    %270 = sbr.rel (0) target = $region33
  $region32: #{lmixer_forward.1} parent=0 // pred_region
    _
  $region33: #{lmixer_forward.1} parent=0 // pred_fallthru
    _

</llo_original>
